<compile_context>
chip_gen: v7x
topology: tpu7x:2x2x1
jax: 0.10.0
libtpu: 0.0.40
codegen_flags: <defaults>
</compile_context>

<pallas_src>
import math

import jax
import jax.numpy as jnp
from jax.experimental import pallas as pl
from jax.experimental.pallas import tpu as pltpu


ROW_TILE_MAX = 1024            # max sublane rows per fused block
FUSED_VMEM_BUDGET = 16 << 20   # pipeline-buffer budget (f32-width accounting)
VMEM_LIMIT_BYTES = 32 << 20    # scoped-VMEM request (<= physical on v5e/v6e/v7x)

# Fallback (two-pass) tiling, used only when a full (rows, H*W) strip cannot
# fit VMEM.  lane_tile=2048 keeps apply-pass in-flight bytes ~12 MiB
# (3 streams x 2 buffers x 256 x 2048 f32) — inside every generation's limit.
FB_ROW_TILE_MAX = 256
FB_LANE_TILE_MAX = 2048


def _round_up(x, m):
    return ((x + m - 1) // m) * m


def _pick_fused_row_tile(R, C, hw):
    """Pick a fused row tile: whole samples, (8,128)-friendly, fits VMEM.

    Prefers >= 2 row tiles (v7x megacore) and tiles dividing R exactly (no
    overhanging rows).  Returns None if even a single full strip is too big,
    in which case the caller uses the two-pass fallback.
    """
    lanes = _round_up(hw, 128)

    def fits(rt):
        big = 3 * 2 * rt * lanes * 4                 # x1, x2, out (double-buffered, f32-width)
        bd = 3 * 2 * rt * _round_up(rt, 128) * 4     # block-diagonal weights (f32)
        small = 4 * 2 * _round_up(rt, 8) * 128 * 4   # bias rows etc.
        return big + bd + small <= FUSED_VMEM_BUDGET

    unit = (C * 8) // math.gcd(C, 8)                 # lcm(C, 8): whole samples + x8 rows
    m_cap = min(ROW_TILE_MAX // unit, max((R - 1) // unit, 0))
    for exact_only in (True, False):                 # prefer tiles that divide R exactly
        for m in range(m_cap, 0, -1):
            rt = m * unit
            if exact_only and R % rt != 0:
                continue
            if fits(rt):
                return rt
    if fits(R):
        return R                                     # single full-extent row tile
    return None


# ---------------------------------------------------------------------------
# Fused path: pool + 1x1-conv gate + apply in ONE pass over x1/x2.
# ---------------------------------------------------------------------------
def _rbm_fused(x1f, x2f, w1m, b1, w2m, b2, N, C, hw, row_tile):
    R = N * C
    grid_rows = pl.cdiv(R, row_tile)
    k = row_tile // C                                # whole samples per row tile

    # Block-diagonal expansions of the 1x1-conv weights so the gate math runs
    # per-row inside the kernel (no sublane<->lane reshapes of pooled values).
    eye_k = jnp.eye(k, dtype=jnp.float32)
    bd1a = jnp.kron(eye_k, w1m[:, :C].astype(jnp.float32))   # half acting on pooled x1
    bd1b = jnp.kron(eye_k, w1m[:, C:].astype(jnp.float32))   # half acting on pooled x2
    bd2 = jnp.kron(eye_k, w2m.astype(jnp.float32))
    b1_rows = jnp.tile(b1.astype(jnp.float32), k).reshape(row_tile, 1)
    b2_rows = jnp.tile(b2.astype(jnp.float32), k).reshape(row_tile, 1)

    inv_hw = 1.0 / float(hw)

    def kernel(x1_ref, x2_ref, bd1a_ref, bd1b_ref, bd2_ref, b1_ref, b2_ref, out_ref):
        # Pooled means: f32 accumulation (bf16-safe).
        m1 = jnp.sum(x1_ref[...].astype(jnp.float32), axis=-1, keepdims=True) * inv_hw
        m2 = jnp.sum(x2_ref[...].astype(jnp.float32), axis=-1, keepdims=True) * inv_hw
        # Zero pooled values for rows past R: an overhanging row tile may hold
        # arbitrary bits (even NaN) that would otherwise leak through the
        # 0 * NaN products of the block-diagonal matvec.
        row = (jax.lax.broadcasted_iota(jnp.int32, (row_tile, 1), 0)
               + pl.program_id(0) * row_tile)
        ok = row < R
        m1 = jnp.where(ok, m1, 0.0)
        m2 = jnp.where(ok, m2, 0.0)
        # Tiny gate math (conv1 -> relu -> conv2 -> sigmoid), all per-row f32.
        h = (jnp.dot(bd1a_ref[...], m1, preferred_element_type=jnp.float32)
             + jnp.dot(bd1b_ref[...], m2, preferred_element_type=jnp.float32)
             + b1_ref[...])
        h = jnp.maximum(h, 0.0)
        z = jnp.dot(bd2_ref[...], h, preferred_element_type=jnp.float32) + b2_ref[...]
        g = 1.0 / (1.0 + jnp.exp(-z))                # sigmoid, kept in f32
        # Fused apply on the still-resident blocks.
        out_ref[...] = (g * x2_ref[...].astype(jnp.float32)
                        + x1_ref[...].astype(jnp.float32)).astype(out_ref.dtype)

    big_spec = pl.BlockSpec((row_tile, hw), lambda i: (i, 0))
    const2d = lambda i: (0, 0)

    return pl.pallas_call(
        kernel,
        out_shape=jax.ShapeDtypeStruct((R, hw), x1f.dtype),
        grid=(grid_rows,),
        in_specs=[
            big_spec,                                          # x1 strip
            big_spec,                                          # x2 strip
            pl.BlockSpec((row_tile, row_tile), const2d),       # block-diag W1[:, :C]
            pl.BlockSpec((row_tile, row_tile), const2d),       # block-diag W1[:, C:]
            pl.BlockSpec((row_tile, row_tile), const2d),       # block-diag W2
            pl.BlockSpec((row_tile, 1), const2d),              # b1 per-row
            pl.BlockSpec((row_tile, 1), const2d),              # b2 per-row
        ],
        out_specs=pl.BlockSpec((row_tile, hw), lambda i: (i, 0)),
        compiler_params=pltpu.CompilerParams(
            dimension_semantics=("parallel",),
            vmem_limit_bytes=VMEM_LIMIT_BYTES),
    )(x1f, x2f, bd1a, bd1b, bd2, b1_rows, b2_rows)


# ---------------------------------------------------------------------------
# Fallback path (huge H*W only): two pipelined passes, no padding anywhere.
# ---------------------------------------------------------------------------
def _rbm_two_pass(x1f, x2f, w1m, b1, w2m, b2, N, C, hw):
    R = N * C
    row_tile = R if R <= FB_ROW_TILE_MAX else FB_ROW_TILE_MAX
    lane_tile = min(_round_up(hw, 128), FB_LANE_TILE_MAX)
    grid_rows = pl.cdiv(R, row_tile)
    grid_hw = pl.cdiv(hw, lane_tile)
    n_chunks = lane_tile // 128

    # ---- Pass 1: per-row pooled sums (lane reduction, ragged tail masked) ---
    def pool_kernel(x1_ref, x2_ref, s1_ref, s2_ref, acc1_ref, acc2_ref):
        j = pl.program_id(1)

        @pl.when(j == 0)
        def _():
            acc1_ref[...] = jnp.zeros_like(acc1_ref)
            acc2_ref[...] = jnp.zeros_like(acc2_ref)

        lane = jax.lax.broadcasted_iota(jnp.int32, (row_tile, lane_tile), 1)
        valid = lane < (hw - j * lane_tile)          # mask the ragged H*W tail
        x1 = jnp.where(valid, x1_ref[...].astype(jnp.float32), 0.0)
        x2 = jnp.where(valid, x2_ref[...].astype(jnp.float32), 0.0)
        # Lane-wide partial sums (pure VPU adds); the XLU cross-lane reduce and
        # the 1-lane-wide store happen only once per row tile.
        for t in range(n_chunks):
            acc1_ref[...] += x1[:, t * 128:(t + 1) * 128]
            acc2_ref[...] += x2[:, t * 128:(t + 1) * 128]

        @pl.when(j == pl.num_programs(1) - 1)
        def _():
            s1_ref[...] = jnp.sum(acc1_ref[...], axis=-1, keepdims=True)
            s2_ref[...] = jnp.sum(acc2_ref[...], axis=-1, keepdims=True)

    s1, s2 = pl.pallas_call(
        pool_kernel,
        out_shape=(jax.ShapeDtypeStruct((R, 1), jnp.float32),
                   jax.ShapeDtypeStruct((R, 1), jnp.float32)),
        grid=(grid_rows, grid_hw),
        in_specs=[pl.BlockSpec((row_tile, lane_tile), lambda i, j: (i, j)),
                  pl.BlockSpec((row_tile, lane_tile), lambda i, j: (i, j))],
        out_specs=(pl.BlockSpec((row_tile, 1), lambda i, j: (i, 0)),
                   pl.BlockSpec((row_tile, 1), lambda i, j: (i, 0))),
        scratch_shapes=[pltpu.VMEM((row_tile, 128), jnp.float32),
                        pltpu.VMEM((row_tile, 128), jnp.float32)],
        compiler_params=pltpu.CompilerParams(
            dimension_semantics=("parallel", "arbitrary"),
            vmem_limit_bytes=VMEM_LIMIT_BYTES),
    )(x1f, x2f)

    # ---- Tiny gate math (1x1 convs on pooled means) in plain JAX, f32 -------
    inv_hw = 1.0 / float(hw)
    m1 = s1.reshape(N, C) * inv_hw
    m2 = s2.reshape(N, C) * inv_hw
    h = jnp.maximum(m1 @ w1m[:, :C].astype(jnp.float32).T
                    + m2 @ w1m[:, C:].astype(jnp.float32).T
                    + b1.astype(jnp.float32)[None, :], 0.0)
    g = jax.nn.sigmoid(h @ w2m.astype(jnp.float32).T + b2.astype(jnp.float32)[None, :])
    g_rows = g.reshape(R, 1)                         # gate stays in f32

    # ---- Pass 2: out = g * x2 + x1 at exact shape (no padding / slicing) ----
    def apply_kernel(g_ref, x1_ref, x2_ref, out_ref):
        out_ref[...] = (g_ref[...] * x2_ref[...].astype(jnp.float32)
                        + x1_ref[...].astype(jnp.float32)).astype(out_ref.dtype)

    return pl.pallas_call(
        apply_kernel,
        out_shape=jax.ShapeDtypeStruct((R, hw), x1f.dtype),
        grid=(grid_rows, grid_hw),
        in_specs=[pl.BlockSpec((row_tile, 1), lambda i, j: (i, 0)),
                  pl.BlockSpec((row_tile, lane_tile), lambda i, j: (i, j)),
                  pl.BlockSpec((row_tile, lane_tile), lambda i, j: (i, j))],
        out_specs=pl.BlockSpec((row_tile, lane_tile), lambda i, j: (i, j)),
        compiler_params=pltpu.CompilerParams(
            dimension_semantics=("parallel", "parallel"),
            vmem_limit_bytes=VMEM_LIMIT_BYTES),
    )(g_rows, x1f, x2f)


def rbm_forward(x1, x2, w1, b1, w2, b2):
    """RBM forward.  x1, x2: (N, C, H, W); w1: (C, 2C, 1, 1); w2: (C, C, 1, 1)."""
    N, C, H, W = x1.shape
    hw = H * W
    R = N * C

    # Copy-free lane-dense 2-D views: rows = N*C on sublanes, H*W on lanes.
    x1f = x1.reshape(R, hw)
    x2f = x2.reshape(R, hw)
    w1m = w1.reshape(C, 2 * C)
    w2m = w2.reshape(C, C)

    row_tile = _pick_fused_row_tile(R, C, hw)
    if row_tile is not None:
        out = _rbm_fused(x1f, x2f, w1m, b1, w2m, b2, N, C, hw, row_tile)
    else:
        # TODO(synk): strips with huge H*W that cannot stay VMEM-resident fall
        # back to the two-pass pipeline (re-reads x1/x2 once more from HBM).
        out = _rbm_two_pass(x1f, x2f, w1m, b1, w2m, b2, N, C, hw)
    return out.reshape(N, C, H, W)


def _reference(x1, x2, w1, b1, w2, b2):
    """Pure-JAX reference mirroring the PyTorch forward."""
    N, C, H, W = x1.shape
    x = jnp.concatenate([x1, x2], axis=1)                     # (N, 2C, H, W)
    pooled = jnp.mean(x, axis=(2, 3))                         # (N, 2C)
    h = pooled @ w1.reshape(C, 2 * C).T + b1
    h = jnp.maximum(h, 0.0)
    g = jax.nn.sigmoid(h @ w2.reshape(C, C).T + b2)           # (N, C)
    return g[:, :, None, None] * x2 + x1


def _make_inputs(key, N, C, H, W):
    in_ch, out_ch = 2 * C, C
    k_x1, k_x2, k_w1, k_b1, k_w2, k_b2 = jax.random.split(key, 6)
    x1 = jax.random.normal(k_x1, (N, C, H, W), jnp.float32)
    x2 = jax.random.normal(k_x2, (N, C, H, W), jnp.float32)
    w1 = jax.random.normal(k_w1, (out_ch, in_ch, 1, 1), jnp.float32) * jnp.sqrt(2.0 / in_ch)
    w2 = jax.random.normal(k_w2, (out_ch, out_ch, 1, 1), jnp.float32) * jnp.sqrt(2.0 / out_ch)
    b1 = jax.random.uniform(k_b1, (out_ch,), jnp.float32,
                            minval=-1.0 / jnp.sqrt(in_ch), maxval=1.0 / jnp.sqrt(in_ch))
    b2 = jax.random.uniform(k_b2, (out_ch,), jnp.float32,
                            minval=-1.0 / jnp.sqrt(out_ch), maxval=1.0 / jnp.sqrt(out_ch))
    return x1, x2, w1, b1, w2, b2


if __name__ == "__main__":
    key = jax.random.PRNGKey(0)
    k_a, k_b, k_c, k_d = jax.random.split(key, 4)

    # 1) Spec shape: single fused row tile (N*C=8), full-extent lanes (hw=256).
    x1, x2, w1, b1, w2, b2 = _make_inputs(k_a, 2, 4, 16, 16)
    out = jax.block_until_ready(rbm_forward(x1, x2, w1, b1, w2, b2))
    ref = _reference(x1, x2, w1, b1, w2, b2)
    assert out.shape == (2, 4, 16, 16)
    assert jnp.allclose(out, ref, atol=1e-4, rtol=1e-4)

    # 2) Unaligned rows (N*C=18) and lanes (hw=1600): exact shapes, no padding.
    x1, x2, w1, b1, w2, b2 = _make_inputs(k_b, 3, 6, 40, 40)
    out = jax.block_until_ready(rbm_forward(x1, x2, w1, b1, w2, b2))
    ref = _reference(x1, x2, w1, b1, w2, b2)
    assert out.shape == (3, 6, 40, 40)
    assert jnp.allclose(out, ref, atol=1e-4, rtol=1e-4)

    # 3) Multi-row-tile fused path (N*C=32 -> 2 row tiles of 16): exercises the
    #    resident block-diagonal weights and >= 2 parallel row tiles (megacore).
    x1, x2, w1, b1, w2, b2 = _make_inputs(k_c, 4, 8, 24, 24)
    out = jax.block_until_ready(rbm_forward(x1, x2, w1, b1, w2, b2))
    ref = _reference(x1, x2, w1, b1, w2, b2)
    assert out.shape == (4, 8, 24, 24)
    assert jnp.allclose(out, ref, atol=1e-4, rtol=1e-4)

    # 4) bf16 inputs: f32 pooled accumulation and f32 gate inside the kernel.
    x1, x2, w1, b1, w2, b2 = _make_inputs(k_d, 2, 4, 16, 16)
    x1b, x2b = x1.astype(jnp.bfloat16), x2.astype(jnp.bfloat16)
    out = jax.block_until_ready(rbm_forward(x1b, x2b, w1, b1, w2, b2))
    ref = _reference(x1b.astype(jnp.float32), x2b.astype(jnp.float32), w1, b1, w2, b2)
    assert out.dtype == jnp.bfloat16
    assert jnp.allclose(out.astype(jnp.float32), ref, atol=2e-2, rtol=2e-2)

    print("KERNEL_OK")
</pallas_src>

<mosaic_0001>
module attributes {stable_mosaic.version = 11 : i64} {
  func.func @kernel(%arg0: i32, %arg1: memref<8x256xf32, #tpu.memory_space<vmem>>, %arg2: memref<8x256xf32, #tpu.memory_space<vmem>>, %arg3: memref<8x8xf32, #tpu.memory_space<vmem>>, %arg4: memref<8x8xf32, #tpu.memory_space<vmem>>, %arg5: memref<8x8xf32, #tpu.memory_space<vmem>>, %arg6: memref<8x1xf32, #tpu.memory_space<vmem>>, %arg7: memref<8x1xf32, #tpu.memory_space<vmem>>, %arg8: memref<8x256xf32, #tpu.memory_space<vmem>>) attributes {dimension_semantics = [#tpu.dimension_semantics<parallel>], iteration_bounds = array<i64: 1>, scalar_prefetch = 0 : i64, scratch_operands = 0 : i64, tpu.core_type = #tpu.core_type<tc>, window_params = [{transform_indices = @transform_0, window_bounds = array<i64: 8, 256>}, {transform_indices = @transform_1, window_bounds = array<i64: 8, 256>}, {pipeline_mode = #tpu.pipeline_mode<synchronous>, transform_indices = @transform_2, window_bounds = array<i64: 8, 8>}, {pipeline_mode = #tpu.pipeline_mode<synchronous>, transform_indices = @transform_3, window_bounds = array<i64: 8, 8>}, {pipeline_mode = #tpu.pipeline_mode<synchronous>, transform_indices = @transform_4, window_bounds = array<i64: 8, 8>}, {pipeline_mode = #tpu.pipeline_mode<synchronous>, transform_indices = @transform_5, window_bounds = array<i64: 8, 1>}, {pipeline_mode = #tpu.pipeline_mode<synchronous>, transform_indices = @transform_6, window_bounds = array<i64: 8, 1>}, {transform_indices = @transform_7, window_bounds = array<i64: 8, 256>}]} {
    %c0 = arith.constant 0 : index
    %c0_0 = arith.constant 0 : index
    %0 = vector.load %arg1[%c0, %c0_0] : memref<8x256xf32, #tpu.memory_space<vmem>>, vector<8x256xf32>
    %cst = arith.constant dense<0.000000e+00> : vector<8xf32>
    %1 = vector.multi_reduction <add>, %0, %cst [1] : vector<8x256xf32> to vector<8xf32>
    %2 = vector.shape_cast %1 : vector<8xf32> to vector<8x1xf32>
    %cst_1 = arith.constant 3.906250e-03 : f32
    %3 = vector.broadcast %cst_1 : f32 to vector<8x1xf32>
    %4 = arith.mulf %2, %3 : vector<8x1xf32>
    %c0_2 = arith.constant 0 : index
    %c0_3 = arith.constant 0 : index
    %5 = vector.load %arg2[%c0_2, %c0_3] : memref<8x256xf32, #tpu.memory_space<vmem>>, vector<8x256xf32>
    %cst_4 = arith.constant dense<0.000000e+00> : vector<8xf32>
    %6 = vector.multi_reduction <add>, %5, %cst_4 [1] : vector<8x256xf32> to vector<8xf32>
    %7 = vector.shape_cast %6 : vector<8xf32> to vector<8x1xf32>
    %cst_5 = arith.constant 3.906250e-03 : f32
    %8 = vector.broadcast %cst_5 : f32 to vector<8x1xf32>
    %9 = arith.mulf %7, %8 : vector<8x1xf32>
    %10 = tpu.iota {dimensions = array<i32: 0>} : vector<8x1xi32>
    %c8_i32 = arith.constant 8 : i32
    %11 = arith.muli %arg0, %c8_i32 : i32
    %12 = vector.broadcast %11 : i32 to vector<8x1xi32>
    %13 = arith.addi %10, %12 : vector<8x1xi32>
    %c8_i32_6 = arith.constant 8 : i32
    %14 = vector.broadcast %c8_i32_6 : i32 to vector<8x1xi32>
    %15 = arith.cmpi slt, %13, %14 : vector<8x1xi32>
    %cst_7 = arith.constant 0.000000e+00 : f32
    %16 = vector.broadcast %cst_7 : f32 to vector<8x1xf32>
    %17 = arith.select %15, %4, %16 : vector<8x1xi1>, vector<8x1xf32>
    %cst_8 = arith.constant 0.000000e+00 : f32
    %18 = vector.broadcast %cst_8 : f32 to vector<8x1xf32>
    %19 = arith.select %15, %9, %18 : vector<8x1xi1>, vector<8x1xf32>
    %c0_9 = arith.constant 0 : index
    %c0_10 = arith.constant 0 : index
    %20 = vector.load %arg3[%c0_9, %c0_10] : memref<8x8xf32, #tpu.memory_space<vmem>>, vector<8x8xf32>
    %cst_11 = arith.constant dense<0.000000e+00> : vector<8x1xf32>
    %21 = tpu.matmul %20, %17, %cst_11 {dimension_numbers = #tpu.dot_dimension_numbers<[1], [0], [0], [1], [0, 0, 1, 1], [], []>} : vector<8x8xf32>, vector<8x1xf32>, vector<8x1xf32> -> vector<8x1xf32>
    %c0_12 = arith.constant 0 : index
    %c0_13 = arith.constant 0 : index
    %22 = vector.load %arg4[%c0_12, %c0_13] : memref<8x8xf32, #tpu.memory_space<vmem>>, vector<8x8xf32>
    %cst_14 = arith.constant dense<0.000000e+00> : vector<8x1xf32>
    %23 = tpu.matmul %22, %19, %cst_14 {dimension_numbers = #tpu.dot_dimension_numbers<[1], [0], [0], [1], [0, 0, 1, 1], [], []>} : vector<8x8xf32>, vector<8x1xf32>, vector<8x1xf32> -> vector<8x1xf32>
    %24 = arith.addf %21, %23 : vector<8x1xf32>
    %c0_15 = arith.constant 0 : index
    %c0_16 = arith.constant 0 : index
    %25 = vector.load %arg6[%c0_15, %c0_16] : memref<8x1xf32, #tpu.memory_space<vmem>>, vector<8x1xf32>
    %26 = arith.addf %24, %25 : vector<8x1xf32>
    %cst_17 = arith.constant 0.000000e+00 : f32
    %27 = vector.broadcast %cst_17 : f32 to vector<8x1xf32>
    %28 = arith.maximumf %26, %27 : vector<8x1xf32>
    %c0_18 = arith.constant 0 : index
    %c0_19 = arith.constant 0 : index
    %29 = vector.load %arg5[%c0_18, %c0_19] : memref<8x8xf32, #tpu.memory_space<vmem>>, vector<8x8xf32>
    %cst_20 = arith.constant dense<0.000000e+00> : vector<8x1xf32>
    %30 = tpu.matmul %29, %28, %cst_20 {dimension_numbers = #tpu.dot_dimension_numbers<[1], [0], [0], [1], [0, 0, 1, 1], [], []>} : vector<8x8xf32>, vector<8x1xf32>, vector<8x1xf32> -> vector<8x1xf32>
    %c0_21 = arith.constant 0 : index
    %c0_22 = arith.constant 0 : index
    %31 = vector.load %arg7[%c0_21, %c0_22] : memref<8x1xf32, #tpu.memory_space<vmem>>, vector<8x1xf32>
    %32 = arith.addf %30, %31 : vector<8x1xf32>
    %cst_23 = arith.constant 0.000000e+00 : f32
    %33 = vector.broadcast %cst_23 : f32 to vector<8x1xf32>
    %34 = arith.subf %33, %32 : vector<8x1xf32>
    %35 = math.exp %34 : vector<8x1xf32>
    %cst_24 = arith.constant 1.000000e+00 : f32
    %36 = vector.broadcast %cst_24 : f32 to vector<8x1xf32>
    %37 = arith.addf %36, %35 : vector<8x1xf32>
    %cst_25 = arith.constant 1.000000e+00 : f32
    %38 = vector.broadcast %cst_25 : f32 to vector<8x1xf32>
    %39 = arith.divf %38, %37 : vector<8x1xf32>
    %c0_26 = arith.constant 0 : index
    %c0_27 = arith.constant 0 : index
    %40 = vector.load %arg2[%c0_26, %c0_27] : memref<8x256xf32, #tpu.memory_space<vmem>>, vector<8x256xf32>
    %41 = vector.broadcast %39 : vector<8x1xf32> to vector<8x256xf32>
    %42 = arith.mulf %41, %40 : vector<8x256xf32>
    %c0_28 = arith.constant 0 : index
    %c0_29 = arith.constant 0 : index
    %43 = vector.load %arg1[%c0_28, %c0_29] : memref<8x256xf32, #tpu.memory_space<vmem>>, vector<8x256xf32>
    %44 = arith.addf %42, %43 : vector<8x256xf32>
    %c0_30 = arith.constant 0 : index
    %c0_31 = arith.constant 0 : index
    %45 = vector.load %arg8[%c0_30, %c0_31] : memref<8x256xf32, #tpu.memory_space<vmem>>, vector<8x256xf32>
    tpu.vector_store %arg8[%c0_30, %c0_31], %44 {strides = array<i32>} : memref<8x256xf32, #tpu.memory_space<vmem>>, vector<8x256xf32>,
    return
  }
  func.func @transform_0(%arg0: i32) -> (i32, i32) {
    %c0_i32 = arith.constant 0 : i32
    %c0_i32_0 = arith.constant 0 : i32
    return %arg0, %c0_i32 : i32, i32
  }
  func.func @transform_1(%arg0: i32) -> (i32, i32) {
    %c0_i32 = arith.constant 0 : i32
    %c0_i32_0 = arith.constant 0 : i32
    return %arg0, %c0_i32 : i32, i32
  }
  func.func @transform_2(%arg0: i32) -> (i32, i32) {
    %c0_i32 = arith.constant 0 : i32
    %c0_i32_0 = arith.constant 0 : i32
    %c0_i32_1 = arith.constant 0 : i32
    return %c0_i32, %c0_i32_0 : i32, i32
  }
  func.func @transform_3(%arg0: i32) -> (i32, i32) {
    %c0_i32 = arith.constant 0 : i32
    %c0_i32_0 = arith.constant 0 : i32
    %c0_i32_1 = arith.constant 0 : i32
    return %c0_i32, %c0_i32_0 : i32, i32
  }
  func.func @transform_4(%arg0: i32) -> (i32, i32) {
    %c0_i32 = arith.constant 0 : i32
    %c0_i32_0 = arith.constant 0 : i32
    %c0_i32_1 = arith.constant 0 : i32
    return %c0_i32, %c0_i32_0 : i32, i32
  }
  func.func @transform_5(%arg0: i32) -> (i32, i32) {
    %c0_i32 = arith.constant 0 : i32
    %c0_i32_0 = arith.constant 0 : i32
    %c0_i32_1 = arith.constant 0 : i32
    return %c0_i32, %c0_i32_0 : i32, i32
  }
  func.func @transform_6(%arg0: i32) -> (i32, i32) {
    %c0_i32 = arith.constant 0 : i32
    %c0_i32_0 = arith.constant 0 : i32
    %c0_i32_1 = arith.constant 0 : i32
    return %c0_i32, %c0_i32_0 : i32, i32
  }
  func.func @transform_7(%arg0: i32) -> (i32, i32) {
    %c0_i32 = arith.constant 0 : i32
    %c0_i32_0 = arith.constant 0 : i32
    return %arg0, %c0_i32 : i32, i32
  }
}

</mosaic_0001>

<llo_original>
// kernel: tpu_custom_call.1
$region0: #{tpu_custom_call.1}
  #allocation0 [shape = 'u32[]', space=smem, size = 0x4, offset = 0x4, fixed_abs, tag = 'smem constant byte address 0x4 - core index']
  #allocation1 [shape = 'u32[144,128]{1,0:T(1,128)}', space=vmem, size = 0x12000, scoped, tag = 'internal scratch']
  %s0 = inlined_call_operand.vmem [shape: f32[8,256], index: 0, kind: input, shape index: {}]
  %s1 = inlined_call_operand.hbm [shape: f32[8,256], index: 1, kind: input, shape index: {}]
  %s2 = inlined_call_operand.vmem [shape: f32[8,8], index: 2, kind: input, shape index: {}]
  %s3 = inlined_call_operand.hbm [shape: f32[8,8], index: 3, kind: input, shape index: {}]
  %s4 = inlined_call_operand.vmem [shape: f32[8,8], index: 4, kind: input, shape index: {}]
  %s5 = inlined_call_operand.vmem [shape: f32[8,1], index: 5, kind: input, shape index: {}]
  %s6 = inlined_call_operand.vmem [shape: f32[8,1], index: 6, kind: input, shape index: {}]
  %s7 = inlined_call_operand.hbm [shape: f32[8,256], index: 7, kind: output, shape index: {}]
  %s8 = sld [smem:[#allocation0]]
  $region46: #{tpu_custom_call.1} parent=0
    _
  %s10 = ssub.s32 1, %s8
  %s11 = scalar_select 0, %s10, %s8
  $region1: #{tpu_custom_call.1} parent=0
    #allocation2 [shape = 'u8[8192]{0}', space=vmem, size = 0x2000, scoped, tag = 'input window, operand 1, single buffered']
    #allocation3 [shape = 's32[1]{0}', space=sflag, size = 0x4, scoped, tag = 'scoped memory for tpu_custom_call.1']
    #allocation4 [shape = 's32[1]{0}', space=sflag, size = 0x4, scoped, tag = 'scoped memory for tpu_custom_call.1']
    #allocation5 [shape = 'u8[4096]{0}', space=vmem, size = 0x1000, scoped, tag = 'input window, operand 3, single buffered']
    #allocation6 [shape = 's32[1]{0}', space=sflag, size = 0x4, scoped, tag = 'scoped memory for tpu_custom_call.1']
    #allocation7 [shape = 'u8[8192]{0}', space=vmem, size = 0x2000, scoped, tag = 'output window, operand 0, single buffered']
    %12 = vsyncpa [#allocation3], 0
    %13 = vsyncpa [#allocation6], 0
    %14 = vsyncpa [#allocation4], 0
    // Predicated region
    $region2: #{tpu_custom_call.1} parent=1 // pred_check
      _
    $region3: #{tpu_custom_call.1} parent=1 // pred_check_branch
      %16 = sbr.rel (0) target = $region5
    $region4: #{tpu_custom_call.1} parent=1 // pred_region
      _
    $region5: #{tpu_custom_call.1} parent=1 // pred_fallthru
      _
    // Predicated region
    $region6: #{tpu_custom_call.1} parent=1 // pred_check
      _
    $region7: #{tpu_custom_call.1} parent=1 // pred_check_branch
      %18 = sbr.rel (0) target = $region9
    $region8: #{tpu_custom_call.1} parent=1 // pred_region
      %s20 = ssub.s32 256, 256
      %21 = vsyncadd [#allocation3], %s20
      %s23 = sshll.u32 [#allocation2], 4
      %s24 = int_to_ptr.vmem [resolvable:$true] %s23
      %26 = dma.hbm_to_vmem [thread:$0]  %s1, 256, %s24, [#allocation3]
    $region9: #{tpu_custom_call.1} parent=1 // pred_fallthru
      _
    // Predicated region
    $region10: #{tpu_custom_call.1} parent=1 // pred_check
      _
    $region11: #{tpu_custom_call.1} parent=1 // pred_check_branch
      %28 = sbr.rel (0) target = $region13
    $region12: #{tpu_custom_call.1} parent=1 // pred_region
      _
    $region13: #{tpu_custom_call.1} parent=1 // pred_fallthru
      _
    // Predicated region
    $region14: #{tpu_custom_call.1} parent=1 // pred_check
      _
    $region15: #{tpu_custom_call.1} parent=1 // pred_check_branch
      %30 = sbr.rel (0) target = $region17
    $region16: #{tpu_custom_call.1} parent=1 // pred_region
      %s32 = ssub.s32 128, 128
      %33 = vsyncadd [#allocation6], %s32
      %s35 = sshll.u32 [#allocation5], 4
      %s36 = int_to_ptr.vmem [resolvable:$true] %s35
      %38 = dma.hbm_to_vmem [thread:$0]  %s3, 128, %s36, [#allocation6]
    $region17: #{tpu_custom_call.1} parent=1 // pred_fallthru
      _
    // Predicated region
    $region18: #{tpu_custom_call.1} parent=1 // pred_check
      _
    $region19: #{tpu_custom_call.1} parent=1 // pred_check_branch
      %40 = sbr.rel (0) target = $region21
    $region20: #{tpu_custom_call.1} parent=1 // pred_region
      _
    $region21: #{tpu_custom_call.1} parent=1 // pred_fallthru
      _
    // Predicated region
    $region22: #{tpu_custom_call.1} parent=1 // pred_check
      _
    $region23: #{tpu_custom_call.1} parent=1 // pred_check_branch
      %42 = sbr.rel (0) target = $region25
    $region24: #{tpu_custom_call.1} parent=1 // pred_region
      _
    $region25: #{tpu_custom_call.1} parent=1 // pred_fallthru
      _
    // Predicated region
    $region26: #{tpu_custom_call.1} parent=1 // pred_check
      _
    $region27: #{tpu_custom_call.1} parent=1 // pred_check_branch
      %44 = sbr.rel (0) target = $region29
    $region28: #{tpu_custom_call.1} parent=1 // pred_region
      _
    $region29: #{tpu_custom_call.1} parent=1 // pred_fallthru
      _
    // Predicated region
    $region30: #{tpu_custom_call.1} parent=1 // pred_check
      _
    $region31: #{tpu_custom_call.1} parent=1 // pred_check_branch
      %46 = sbr.rel (0) target = $region33
    $region32: #{tpu_custom_call.1} parent=1 // pred_region
      %47 = dma.done [#allocation3], 256
    $region33: #{tpu_custom_call.1} parent=1 // pred_fallthru
      _
    // Predicated region
    $region34: #{tpu_custom_call.1} parent=1 // pred_check
      _
    $region35: #{tpu_custom_call.1} parent=1 // pred_check_branch
      %49 = sbr.rel (0) target = $region37
    $region36: #{tpu_custom_call.1} parent=1 // pred_region
      %50 = dma.done [#allocation6], 128
    $region37: #{tpu_custom_call.1} parent=1 // pred_fallthru
      _
    %v51 = vld [vmem:[%s0] sm:$0xff]
    %v52 = vld [vmem:[%s0 + $0x8] sm:$0xff]
    %v53 = vadd.f32 %v51, %v52
    %54 = vadd.xlane.f32.xlu0 %v53
    %v55 = vpop.xlane.xlu0 %54
    %v56 = vmul.f32 %v55, 0.00390625
    %v57 = vld [vmem:[#allocation2] sm:$0xff]
    %v58 = vld [vmem:[#allocation2 + $0x8] sm:$0xff]
    %v59 = vadd.f32 %v57, %v58
    %60 = vadd.xlane.f32.xlu0 %v59
    %v61 = vpop.xlane.xlu0 %60
    %v62 = vmul.f32 %v61, 0.00390625
    %v63 = vlaneseq
    %v64 = vshrl.u32 %v63, 7
    %s65 = smul.u32 0, 8
    %v66 = vstv %s65
    %v67 = vadd.s32 %v64, %v66
    %vm68 = vcmp.lt.s32.totalorder %v67, 8
    %v69 = vsel %vm68, %v56, 0.0
    %v70 = vsel %vm68, %v62, 0.0
    %v71 = vld [vmem:[%s2] sm:$0xff]
    %v72 = vld [vmem:[#allocation5] sm:$0xff]
    %vm73 = vcmask 64512
    %v75 = vsel %vm73, %v72, 0
    %77 = vmatprep.subr.mxu0 0.0
    %78 = vmatpush1.msra.mxu0 %v70
    %79 = vmatprep.subr.mxu0 0.0
    %80 = vmatpush1.msra.mxu0 0.0
    %81 = vmatprep.subr.mxu0 0.0
    %82 = vmatpush1.msra.mxu0 0.0
    %83 = vmatprep.subr.mxu0 0.0
    %84 = vmatpush1.msra.mxu0 0.0
    %85 = vmatprep.subr.mxu0 0.0
    %86 = vmatpush1.msra.mxu0 0.0
    %87 = vmatprep.subr.mxu0 0.0
    %88 = vmatpush1.msra.mxu0 0.0
    %89 = vmatprep.subr.mxu0 0.0
    %90 = vmatpush1.msra.mxu0 0.0
    %91 = vmatprep.subr.mxu0 0.0
    %92 = vmatpush1.msra.mxu0 0.0
    %93 = vmatprep.subr.mxu0 0.0
    %94 = vmatpush1.msra.mxu0 0.0
    %95 = vmatprep.subr.mxu0 0.0
    %96 = vmatpush1.msra.mxu0 0.0
    %97 = vmatprep.subr.mxu0 0.0
    %98 = vmatpush1.msra.mxu0 0.0
    %99 = vmatprep.subr.mxu0 0.0
    %100 = vmatpush1.msra.mxu0 0.0
    %101 = vmatprep.subr.mxu0 0.0
    %102 = vmatpush1.msra.mxu0 0.0
    %103 = vmatprep.subr.mxu0 0.0
    %104 = vmatpush1.msra.mxu0 0.0
    %105 = vmatprep.subr.mxu0 0.0
    %106 = vmatpush1.msra.mxu0 0.0
    %107 = vmatprep.subr.mxu0 0.0
    %108 = vmatpush1.msra.mxu0 0.0
    %109 = vmatprep.subr.mxu0 0.0
    %110 = vmatpush1.msra.mxu0 0.0
    %111 = vmatprep.subr.mxu0 0.0
    %112 = vmatpush1.msra.mxu0 0.0
    %113 = vmatprep.subr.mxu0 0.0
    %114 = vmatpush1.msra.mxu0 0.0
    %115 = vmatprep.subr.mxu0 0.0
    %116 = vmatpush1.msra.mxu0 0.0
    %117 = vmatprep.subr.mxu0 0.0
    %118 = vmatpush1.msra.mxu0 0.0
    %119 = vmatprep.subr.mxu0 0.0
    %120 = vmatpush1.msra.mxu0 0.0
    %121 = vmatprep.subr.mxu0 0.0
    %122 = vmatpush1.msra.mxu0 0.0
    %123 = vmatprep.subr.mxu0 0.0
    %124 = vmatpush1.msra.mxu0 0.0
    %125 = vmatprep.subr.mxu0 0.0
    %126 = vmatpush1.msra.mxu0 0.0
    %127 = vmatprep.subr.mxu0 0.0
    %128 = vmatpush1.msra.mxu0 0.0
    %129 = vmatprep.subr.mxu0 0.0
    %130 = vmatpush1.msra.mxu0 0.0
    %131 = vmatprep.subr.mxu0 0.0
    %132 = vmatpush1.msra.mxu0 0.0
    %133 = vmatprep.subr.mxu0 0.0
    %134 = vmatpush1.msra.mxu0 0.0
    %135 = vmatprep.subr.mxu0 0.0
    %136 = vmatpush1.msra.mxu0 0.0
    %137 = vmatprep.subr.mxu0 0.0
    %138 = vmatpush1.msra.mxu0 0.0
    %139 = vmatprep.subr.mxu0 0.0
    %140 = vmatpush1.msra.mxu0 0.0
    %141 = vmatprep.mubr.f32.mxu0 0.0
    %142 = vmatmul.mubr.f32.gmra.mrb[0].mxu0 %v75
    %v143 = vpop.f32.mrb[0].mxu0
    %v144 = vadd.f32 0.0, %v143
    %v145 = vpop.f32.mrb[0].mxu0
    %146 = vdwg.mxu0
    %v148 = vsel %vm73, %v71, 0
    %150 = vmatprep.subr.mxu0 0.0
    %151 = vmatpush1.msra.mxu0 %v69
    %152 = vmatprep.subr.mxu0 0.0
    %153 = vmatpush1.msra.mxu0 0.0
    %154 = vmatprep.subr.mxu0 0.0
    %155 = vmatpush1.msra.mxu0 0.0
    %156 = vmatprep.subr.mxu0 0.0
    %157 = vmatpush1.msra.mxu0 0.0
    %158 = vmatprep.subr.mxu0 0.0
    %159 = vmatpush1.msra.mxu0 0.0
    %160 = vmatprep.subr.mxu0 0.0
    %161 = vmatpush1.msra.mxu0 0.0
    %162 = vmatprep.subr.mxu0 0.0
    %163 = vmatpush1.msra.mxu0 0.0
    %164 = vmatprep.subr.mxu0 0.0
    %165 = vmatpush1.msra.mxu0 0.0
    %166 = vmatprep.subr.mxu0 0.0
    %167 = vmatpush1.msra.mxu0 0.0
    %168 = vmatprep.subr.mxu0 0.0
    %169 = vmatpush1.msra.mxu0 0.0
    %170 = vmatprep.subr.mxu0 0.0
    %171 = vmatpush1.msra.mxu0 0.0
    %172 = vmatprep.subr.mxu0 0.0
    %173 = vmatpush1.msra.mxu0 0.0
    %174 = vmatprep.subr.mxu0 0.0
    %175 = vmatpush1.msra.mxu0 0.0
    %176 = vmatprep.subr.mxu0 0.0
    %177 = vmatpush1.msra.mxu0 0.0
    %178 = vmatprep.subr.mxu0 0.0
    %179 = vmatpush1.msra.mxu0 0.0
    %180 = vmatprep.subr.mxu0 0.0
    %181 = vmatpush1.msra.mxu0 0.0
    %182 = vmatprep.subr.mxu0 0.0
    %183 = vmatpush1.msra.mxu0 0.0
    %184 = vmatprep.subr.mxu0 0.0
    %185 = vmatpush1.msra.mxu0 0.0
    %186 = vmatprep.subr.mxu0 0.0
    %187 = vmatpush1.msra.mxu0 0.0
    %188 = vmatprep.subr.mxu0 0.0
    %189 = vmatpush1.msra.mxu0 0.0
    %190 = vmatprep.subr.mxu0 0.0
    %191 = vmatpush1.msra.mxu0 0.0
    %192 = vmatprep.subr.mxu0 0.0
    %193 = vmatpush1.msra.mxu0 0.0
    %194 = vmatprep.subr.mxu0 0.0
    %195 = vmatpush1.msra.mxu0 0.0
    %196 = vmatprep.subr.mxu0 0.0
    %197 = vmatpush1.msra.mxu0 0.0
    %198 = vmatprep.subr.mxu0 0.0
    %199 = vmatpush1.msra.mxu0 0.0
    %200 = vmatprep.subr.mxu0 0.0
    %201 = vmatpush1.msra.mxu0 0.0
    %202 = vmatprep.subr.mxu0 0.0
    %203 = vmatpush1.msra.mxu0 0.0
    %204 = vmatprep.subr.mxu0 0.0
    %205 = vmatpush1.msra.mxu0 0.0
    %206 = vmatprep.subr.mxu0 0.0
    %207 = vmatpush1.msra.mxu0 0.0
    %208 = vmatprep.subr.mxu0 0.0
    %209 = vmatpush1.msra.mxu0 0.0
    %210 = vmatprep.subr.mxu0 0.0
    %211 = vmatpush1.msra.mxu0 0.0
    %212 = vmatprep.subr.mxu0 0.0
    %213 = vmatpush1.msra.mxu0 0.0
    %214 = vmatprep.mubr.f32.mxu0 0.0
    %215 = vmatmul.mubr.f32.gmra.mrb[0].mxu0 %v148
    %v216 = vpop.f32.mrb[0].mxu0
    %v217 = vadd.f32 %v144, %v216
    %v218 = vpop.f32.mrb[0].mxu0
    %219 = vdwg.mxu0
    %v220 = vld [vmem:[%s5] sm:$0xff]
    %v221 = vadd.f32 %v217, %v220
    %v222 = vmax.f32 %v221, 0.0
    %v223 = vld [vmem:[%s4] sm:$0xff]
    %v224 = vld [vmem:[%s6] sm:$0xff]
    %v226 = vsel %vm73, %v223, 0
    %228 = vmatprep.subr.mxu0 0.0
    %229 = vmatpush1.msra.mxu0 %v222
    %230 = vmatprep.subr.mxu0 0.0
    %231 = vmatpush1.msra.mxu0 0.0
    %232 = vmatprep.subr.mxu0 0.0
    %233 = vmatpush1.msra.mxu0 0.0
    %234 = vmatprep.subr.mxu0 0.0
    %235 = vmatpush1.msra.mxu0 0.0
    %236 = vmatprep.subr.mxu0 0.0
    %237 = vmatpush1.msra.mxu0 0.0
    %238 = vmatprep.subr.mxu0 0.0
    %239 = vmatpush1.msra.mxu0 0.0
    %240 = vmatprep.subr.mxu0 0.0
    %241 = vmatpush1.msra.mxu0 0.0
    %242 = vmatprep.subr.mxu0 0.0
    %243 = vmatpush1.msra.mxu0 0.0
    %244 = vmatprep.subr.mxu0 0.0
    %245 = vmatpush1.msra.mxu0 0.0
    %246 = vmatprep.subr.mxu0 0.0
    %247 = vmatpush1.msra.mxu0 0.0
    %248 = vmatprep.subr.mxu0 0.0
    %249 = vmatpush1.msra.mxu0 0.0
    %250 = vmatprep.subr.mxu0 0.0
    %251 = vmatpush1.msra.mxu0 0.0
    %252 = vmatprep.subr.mxu0 0.0
    %253 = vmatpush1.msra.mxu0 0.0
    %254 = vmatprep.subr.mxu0 0.0
    %255 = vmatpush1.msra.mxu0 0.0
    %256 = vmatprep.subr.mxu0 0.0
    %257 = vmatpush1.msra.mxu0 0.0
    %258 = vmatprep.subr.mxu0 0.0
    %259 = vmatpush1.msra.mxu0 0.0
    %260 = vmatprep.subr.mxu0 0.0
    %261 = vmatpush1.msra.mxu0 0.0
    %262 = vmatprep.subr.mxu0 0.0
    %263 = vmatpush1.msra.mxu0 0.0
    %264 = vmatprep.subr.mxu0 0.0
    %265 = vmatpush1.msra.mxu0 0.0
    %266 = vmatprep.subr.mxu0 0.0
    %267 = vmatpush1.msra.mxu0 0.0
    %268 = vmatprep.subr.mxu0 0.0
    %269 = vmatpush1.msra.mxu0 0.0
    %270 = vmatprep.subr.mxu0 0.0
    %271 = vmatpush1.msra.mxu0 0.0
    %272 = vmatprep.subr.mxu0 0.0
    %273 = vmatpush1.msra.mxu0 0.0
    %274 = vmatprep.subr.mxu0 0.0
    %275 = vmatpush1.msra.mxu0 0.0
    %276 = vmatprep.subr.mxu0 0.0
    %277 = vmatpush1.msra.mxu0 0.0
    %278 = vmatprep.subr.mxu0 0.0
    %279 = vmatpush1.msra.mxu0 0.0
    %280 = vmatprep.subr.mxu0 0.0
    %281 = vmatpush1.msra.mxu0 0.0
    %282 = vmatprep.subr.mxu0 0.0
    %283 = vmatpush1.msra.mxu0 0.0
    %284 = vmatprep.subr.mxu0 0.0
    %285 = vmatpush1.msra.mxu0 0.0
    %286 = vmatprep.subr.mxu0 0.0
    %287 = vmatpush1.msra.mxu0 0.0
    %288 = vmatprep.subr.mxu0 0.0
    %289 = vmatpush1.msra.mxu0 0.0
    %290 = vmatprep.subr.mxu0 0.0
    %291 = vmatpush1.msra.mxu0 0.0
    %292 = vmatprep.mubr.f32.mxu0 0.0
    %293 = vmatmul.mubr.f32.gmra.mrb[0].mxu0 %v226
    %v294 = vpop.f32.mrb[0].mxu0
    %v295 = vadd.f32 %v224, %v294
    %v296 = vpop.f32.mrb[0].mxu0
    %297 = vdwg.mxu0
    %v298 = vsub.f32 0.0, %v295
    %v299 = vmul.f32 %v298, 1.442695
    %v300 = vpow.pop %v299
    %v301 = vadd.f32 %v300, 1.0
    %v302 = vrcp.pop %v301
    %v303 = vmul.f32 1.0, %v302
    %305 = vset.pattern.permute.xlu0 0
    %306 = vperm.xlu0 %305, %v303
    %v307 = vpop.permute.xlu0 %306
    %v309 = vmul.f32 %v307, %v57
    %v310 = vmul.f32 %v307, %v58
    %v311 = vadd.f32 %v309, %v51
    %v312 = vadd.f32 %v310, %v52
    %313 = vst [vmem:[#allocation7] sm:$0xff] %v311
    %314 = vst [vmem:[#allocation7 + $0x8] sm:$0xff] %v312
    // Predicated region
    $region38: #{tpu_custom_call.1} parent=1 // pred_check
      _
    $region39: #{tpu_custom_call.1} parent=1 // pred_check_branch
      %316 = sbr.rel (0) target = $region41
    $region40: #{tpu_custom_call.1} parent=1 // pred_region
      %s318 = ssub.s32 256, 256
      %319 = vsyncadd [#allocation4], %s318
      %s321 = sshll.u32 [#allocation7], 4
      %s322 = int_to_ptr.vmem [resolvable:$true] %s321
      %324 = dma.vmem_to_hbm [thread:$0]  %s322, 256, %s7, [#allocation4]
    $region41: #{tpu_custom_call.1} parent=1 // pred_fallthru
      _
    // Predicated region
    $region42: #{tpu_custom_call.1} parent=1 // pred_check
      _
    $region43: #{tpu_custom_call.1} parent=1 // pred_check_branch
      %326 = sbr.rel (0) target = $region45
    $region44: #{tpu_custom_call.1} parent=1 // pred_region
      %327 = dma.done [#allocation4], 256
    $region45: #{tpu_custom_call.1} parent=1 // pred_fallthru
      _
    %328 = vsyncpa [#allocation3], 1
    %329 = vsyncpa [#allocation6], 1
    %330 = vsyncpa [#allocation4], 1

</llo_original>
